<compile_context>
chip_gen: v5e
topology: v5e:2x2
jax: 0.10.0
libtpu: 0.0.40
codegen_flags: <defaults>
</compile_context>

<pallas_src>
import jax
import jax.numpy as jnp
from jax.experimental import pallas as pl
from jax.experimental.pallas import tpu as pltpu


# ----------------------------------------------------------------------------
# Host-side packing of all small tensors into one padded slab
# ----------------------------------------------------------------------------
def _pack_slab(named_arrays):
    """Pack 2-D arrays into one (8,128)-padded f32 slab.

    Returns (slab, layout) where layout[name] = (row_start, rows, cols) with
    every row_start a multiple of 8, so in-kernel static ref slices stay on
    sublane-tile boundaries (no relayout copies).
    """
    width = max(int(a.shape[1]) for _, a in named_arrays)
    width = ((width + 127) // 128) * 128
    blocks, layout, r = [], {}, 0
    for name, a in named_arrays:
        a = jnp.asarray(a, jnp.float32)
        rows, cols = int(a.shape[0]), int(a.shape[1])
        rpad = ((rows + 7) // 8) * 8
        blocks.append(jnp.pad(a, ((0, rpad - rows), (0, width - cols))))
        layout[name] = (r, rows, cols)
        r += rpad
    return jnp.concatenate(blocks, axis=0), layout


# ----------------------------------------------------------------------------
# Fused forward kernel
# ----------------------------------------------------------------------------
def _make_fused_kernel(layout, n_enc, n_p_layers, n_s_layers, num_classes,
                       mxu_dtype):
    """Build the fused AttrAtk forward kernel for a fixed module config."""

    def kernel(a_p_ref, a_s_ref, slab_ref, o_ref):
        def get(name):
            r0, rows, cols = layout[name]          # static python ints
            return slab_ref[r0:r0 + rows, 0:cols]  # static ref slice -> load

        def mm(x, w):
            # MXU matmul with f32 accumulation.  mxu_dtype can be bf16 on
            # v5e/v6e/v7x for large graphs; default f32 keeps exact PyTorch
            # f32 semantics.
            return jnp.dot(x.astype(mxu_dtype), w.astype(mxu_dtype),
                           preferred_element_type=jnp.float32)

        def gcn_layer(a, h, w, b, relu):
            # Reassociate: (A @ H) @ W for expanding layers (in < out) so the
            # O(N^2) term contracts over the smaller dim; A @ (H @ W) for
            # contracting layers (e.g. hidden -> num_classes).
            if w.shape[0] < w.shape[1]:
                h = mm(mm(a, h), w) + b
            else:
                h = mm(a, mm(h, w)) + b
            return jnp.maximum(h, 0.0) if relu else h

        # ------------- p-branch GCN: A_p loaded once, reused -----------------
        a_p = a_p_ref[...]
        h = get("xp")
        for li in range(n_p_layers):
            h = gcn_layer(a_p, h, get(f"p_w{li}"), get(f"p_b{li}"),
                          relu=(li < n_p_layers - 1))
            # TODO(synk): inter-layer dropout is identity (inference mode).
        x_p_all = h                                          # (N_P, C)

        # ----- in-kernel gather via one-hot selection, weights folded in -----
        idx = get("idx").astype(jnp.int32)                   # (N_S, 1)
        n_s_rows = idx.shape[0]
        n_p_rows = a_p.shape[0]
        lane_ids = jax.lax.broadcasted_iota(jnp.int32, (n_s_rows, n_p_rows), 1)
        sel = (lane_ids == idx).astype(jnp.float32)          # (N_S, N_P)
        # Gather the p-branch rows and the per-node p/s weights with the same
        # selection matrix (pure-copy semantics -> keep f32 on the MXU).
        x_p = jnp.dot(sel, x_p_all, preferred_element_type=jnp.float32)
        ps = jnp.dot(sel, get("ps_cols"), preferred_element_type=jnp.float32)
        p_w = ps[:, 0:1]                                     # (N_S, 1)
        s_w = ps[:, 1:2]                                     # (N_S, 1)

        # ---- s-branch: feature encoders fused into first GCN transform ------
        # concat_i(x_i @ We_i + be_i) @ W0 == sum_i (x_i @ We_i + be_i) @ W0_i
        # (W0 row blocks pre-split on the host).
        hw = None
        for ei in range(n_enc):
            part = mm(get(f"enc_x{ei}"), get(f"enc_w{ei}")) + get(f"enc_b{ei}")
            contrib = mm(part, get(f"s_w0_{ei}"))
            hw = contrib if hw is None else hw + contrib
        a_s = a_s_ref[...]
        h = mm(a_s, hw) + get("s_b0")
        if n_s_layers > 1:
            h = jnp.maximum(h, 0.0)
        for li in range(1, n_s_layers):
            h = gcn_layer(a_s, h, get(f"s_w{li}"), get(f"s_b{li}"),
                          relu=(li < n_s_layers - 1))
        x_s = h                                              # (N_S, C)

        # ------ BatchNorm1d (training batch stats, eps=1e-5) + combine -------
        eps = 1e-5

        def bn(x, g_, b_):
            mu = jnp.mean(x, axis=0, keepdims=True)
            d = x - mu
            var = jnp.mean(d * d, axis=0, keepdims=True)
            return d * jax.lax.rsqrt(var + eps) * g_ + b_

        xp_n = bn(x_p, get("bn0_g"), get("bn0_b"))
        xs_n = bn(x_s, get("bn1_g"), get("bn1_b"))

        # The narrow (C-wide) store happens exactly once, at the very end.
        o_ref[...] = (p_w * xp_n + s_w * xs_n).astype(o_ref.dtype)

    return kernel


def attr_atk_forward(batch_p, batch_s, batch_idx,
                     p_params, s_params, enc_params,
                     bn0, bn1, p_weight, s_weight,
                     mxu_dtype=jnp.float32):
    """AttrAtk.forward as a single fused pallas_call (3 input DMAs total)."""
    a_p, xp_feat = batch_p
    a_s, s_feats = batch_s
    names = list(s_feats.keys())
    n_enc = len(names)
    n_s_rows = int(batch_idx.shape[0])
    n_p_rows = int(a_p.shape[0])
    num_classes = int(p_params[-1][0].shape[1])

    # ---- host-side packing of every small tensor into ONE slab -------------
    # (layout plumbing only; in a real loop pre-pack the params once.)
    named = [
        ("idx", batch_idx.astype(jnp.float32).reshape(n_s_rows, 1)),
        ("ps_cols", jnp.concatenate([p_weight.reshape(-1, 1),
                                     s_weight.reshape(-1, 1)], axis=1)),
        ("xp", xp_feat),
    ]
    s_w0, s_b0 = s_params[0]
    off = 0
    for ei, k in enumerate(names):
        we, be = enc_params[k]
        width = int(we.shape[1])
        named.append((f"enc_x{ei}", s_feats[k]))
        named.append((f"enc_w{ei}", we))
        named.append((f"enc_b{ei}", be.reshape(1, -1)))
        # Pre-split W0 rows on the host (no in-kernel value slices of W0).
        named.append((f"s_w0_{ei}", s_w0[off:off + width, :]))
        off += width
    named.append(("s_b0", s_b0.reshape(1, -1)))
    for li in range(1, len(s_params)):
        w, b = s_params[li]
        named.append((f"s_w{li}", w))
        named.append((f"s_b{li}", b.reshape(1, -1)))
    for li, (w, b) in enumerate(p_params):
        named.append((f"p_w{li}", w))
        named.append((f"p_b{li}", b.reshape(1, -1)))
    named.append(("bn0_g", bn0[0].reshape(1, -1)))
    named.append(("bn0_b", bn0[1].reshape(1, -1)))
    named.append(("bn1_g", bn1[0].reshape(1, -1)))
    named.append(("bn1_b", bn1[1].reshape(1, -1)))
    slab, layout = _pack_slab(named)

    # Adjacencies are the only O(N^2) arrays; store them in mxu_dtype in HBM
    # (bf16 halves their DMA bytes at non-toy sizes, f32 default is exact).
    a_p_in = a_p.astype(mxu_dtype)
    a_s_in = a_s.astype(mxu_dtype)

    kernel = _make_fused_kernel(layout, n_enc, len(p_params), len(s_params),
                                num_classes, mxu_dtype)

    # Rough roofline hint for XLA's scheduler.
    flops = 2 * n_s_rows * n_p_rows * (num_classes + 2)
    for w, _ in p_params:
        di, do = int(w.shape[0]), int(w.shape[1])
        flops += 2 * n_p_rows * di * do + 2 * n_p_rows * n_p_rows * min(di, do)
    for w, _ in s_params:
        di, do = int(w.shape[0]), int(w.shape[1])
        flops += 2 * n_s_rows * di * do + 2 * n_s_rows * n_s_rows * min(di, do)
    for k in names:
        we, _ = enc_params[k]
        flops += 2 * n_s_rows * int(we.shape[0]) * int(we.shape[1])
    bytes_accessed = (int(a_p_in.size) * a_p_in.dtype.itemsize
                      + int(a_s_in.size) * a_s_in.dtype.itemsize
                      + int(slab.size) * 4
                      + n_s_rows * num_classes * 4)
    cost = pl.CostEstimate(flops=flops, transcendentals=0,
                           bytes_accessed=bytes_accessed)

    # TODO(synk): PyTorch indexing raises on out-of-range batch_idx; the
    # one-hot gather silently yields a zero row instead.
    vmem = pl.BlockSpec(memory_space=pltpu.MemorySpace.VMEM)
    return pl.pallas_call(
        kernel,
        in_specs=[vmem, vmem, vmem],
        out_specs=vmem,
        out_shape=jax.ShapeDtypeStruct((n_s_rows, num_classes), jnp.float32),
        compiler_params=pltpu.CompilerParams(
            # Raise scoped VMEM above the 16/32 MiB defaults so the
            # "A_hat resident in VMEM" design scales; kept below v7x's
            # 64 MiB physical VMEM.
            vmem_limit_bytes=48 * 1024 * 1024),
        cost_estimate=cost,
    )(a_p_in, a_s_in, slab)


# ----------------------------------------------------------------------------
# Parameter construction / reference (plain JAX, outside the hot path)
# ----------------------------------------------------------------------------
def init_graph_encoder(key, in_c, hidden_c, out_c, num_layers):
    """GCN-style GraphEncoder: in -> hidden x (L-1) -> out (num_classes)."""
    dims = [in_c] + [hidden_c] * (num_layers - 1) + [out_c]
    params = []
    for i in range(num_layers):
        key, k_w = jax.random.split(key)
        w = jax.random.normal(k_w, (dims[i], dims[i + 1]), jnp.float32) * 0.1
        b = jnp.zeros((1, dims[i + 1]), jnp.float32)
        params.append((w, b))
    return params


def make_norm_adj(key, n):
    a = (jax.random.uniform(key, (n, n)) < 0.2).astype(jnp.float32)
    a = jnp.maximum(a, a.T)
    a = a + jnp.eye(n, dtype=jnp.float32)
    d = jnp.sum(a, axis=1)
    d_inv_sqrt = 1.0 / jnp.sqrt(d)
    return a * d_inv_sqrt[:, None] * d_inv_sqrt[None, :]


def reference_forward(batch_p, batch_s, batch_idx,
                      p_params, s_params, enc_params,
                      bn0, bn1, p_weight, s_weight):
    """Pure-JAX reference (same semantics) for a correctness check."""
    a_p, xp = batch_p
    a_s, feats = batch_s

    def gcn(a, h, params):
        for i, (w, b) in enumerate(params):
            h = a @ (h @ w) + b
            if i < len(params) - 1:
                h = jnp.maximum(h, 0.0)
        return h

    def bn(x, g, b):
        mu = jnp.mean(x, axis=0, keepdims=True)
        var = jnp.mean((x - mu) ** 2, axis=0, keepdims=True)
        return (x - mu) / jnp.sqrt(var + 1e-5) * g + b

    x_p = gcn(a_p, xp, p_params)[batch_idx]
    parts = [feats[k] @ enc_params[k][0] + enc_params[k][1] for k in feats]
    x_s = gcn(a_s, jnp.concatenate(parts, axis=-1), s_params)
    return (p_weight[batch_idx] * bn(x_p, *bn0)
            + s_weight[batch_idx] * bn(x_s, *bn1))


# ----------------------------------------------------------------------------
# Driver
# ----------------------------------------------------------------------------
if __name__ == "__main__":
    # Small config consistent with the module's __init__.
    N_P, N_S = 32, 16                 # batch_p nodes, batch_s nodes (== len(batch_idx))
    x_in, mix_in, rwse_in = 8, 6, 4   # in_channels
    x_hidden, mix_hidden, rwse_hidden = 16, 8, 8
    gnn_hidden = 16
    num_classes = 4
    gnn_layers = 2
    num_nodes = N_P                   # for p_weight / s_weight

    keys = jax.random.split(jax.random.PRNGKey(0), 16)

    # Graphs + node features
    a_p = make_norm_adj(keys[0], N_P)
    a_s = make_norm_adj(keys[1], N_S)
    xp_feat = jax.random.normal(keys[2], (N_P, x_in), jnp.float32)
    batch_s_feats = {
        "x":    jax.random.normal(keys[3], (N_S, x_in), jnp.float32),
        "mix":  jax.random.normal(keys[4], (N_S, mix_in), jnp.float32),
        "rwse": jax.random.normal(keys[5], (N_S, rwse_in), jnp.float32),
    }
    batch_idx = jax.random.permutation(keys[6], N_P)[:N_S]

    # LinearEncoder parameters (pe_types = ['trans_x', 'mix', 'rwse'])
    enc_params = {
        "x":    (jax.random.normal(keys[7], (x_in, x_hidden), jnp.float32) * 0.1,
                 jnp.zeros((1, x_hidden), jnp.float32)),
        "mix":  (jax.random.normal(keys[8], (mix_in, mix_hidden), jnp.float32) * 0.1,
                 jnp.zeros((1, mix_hidden), jnp.float32)),
        "rwse": (jax.random.normal(keys[9], (rwse_in, rwse_hidden), jnp.float32) * 0.1,
                 jnp.zeros((1, rwse_hidden), jnp.float32)),
    }
    gnn_in = x_hidden + mix_hidden + rwse_hidden

    # GraphEncoders
    p_params = init_graph_encoder(keys[10], x_in, gnn_hidden * 4, num_classes, gnn_layers)
    s_params = init_graph_encoder(keys[11], gnn_in, gnn_hidden, num_classes, gnn_layers)

    # BatchNorm1d(num_classes) x2 (affine params at PyTorch defaults)
    bn0 = (jnp.ones((1, num_classes), jnp.float32), jnp.zeros((1, num_classes), jnp.float32))
    bn1 = (jnp.ones((1, num_classes), jnp.float32), jnp.zeros((1, num_classes), jnp.float32))

    # p_weight / s_weight = ones(num_nodes, 1) * 0.5
    p_weight = jnp.ones((num_nodes, 1), jnp.float32) * 0.5
    s_weight = jnp.ones((num_nodes, 1), jnp.float32) * 0.5

    out = attr_atk_forward(
        (a_p, xp_feat), (a_s, batch_s_feats), batch_idx,
        p_params, s_params, enc_params, bn0, bn1, p_weight, s_weight)
    jax.block_until_ready(out)
    assert out.shape == (N_S, num_classes), out.shape

    with jax.default_matmul_precision("highest"):
        ref = reference_forward(
            (a_p, xp_feat), (a_s, batch_s_feats), batch_idx,
            p_params, s_params, enc_params, bn0, bn1, p_weight, s_weight)
    err = float(jnp.max(jnp.abs(out - ref)))
    assert err < 5e-3, f"max abs err {err}"

    print("KERNEL_OK")
</pallas_src>

<mosaic_0001>
module attributes {stable_mosaic.version = 11 : i64} {
  func.func @kernel(%arg0: memref<32x32xf32, #tpu.memory_space<vmem>>, %arg1: memref<16x16xf32, #tpu.memory_space<vmem>>, %arg2: memref<360x128xf32, #tpu.memory_space<vmem>>, %arg3: memref<16x4xf32, #tpu.memory_space<vmem>>) attributes {dimension_semantics = [], scalar_prefetch = 0 : i64, scratch_operands = 0 : i64, tpu.core_type = #tpu.core_type<tc>} {
    %c0 = arith.constant 0 : index
    %c0_0 = arith.constant 0 : index
    %0 = vector.load %arg0[%c0, %c0_0] : memref<32x32xf32, #tpu.memory_space<vmem>>, vector<32x32xf32>
    %c48 = arith.constant 48 : index
    %c0_1 = arith.constant 0 : index
    %1 = vector.load %arg2[%c48, %c0_1] : memref<360x128xf32, #tpu.memory_space<vmem>>, vector<32x8xf32>
    %c240 = arith.constant 240 : index
    %c0_2 = arith.constant 0 : index
    %2 = vector.load %arg2[%c240, %c0_2] : memref<360x128xf32, #tpu.memory_space<vmem>>, vector<8x64xf32>
    %c248 = arith.constant 248 : index
    %c0_3 = arith.constant 0 : index
    %3 = vector.load %arg2[%c248, %c0_3] : memref<360x128xf32, #tpu.memory_space<vmem>>, vector<1x64xf32>
    %cst = arith.constant dense<0.000000e+00> : vector<32x8xf32>
    %4 = tpu.matmul %0, %1, %cst {dimension_numbers = #tpu.dot_dimension_numbers<[1], [0], [0], [1], [0, 0, 1, 1], [], []>} : vector<32x32xf32>, vector<32x8xf32>, vector<32x8xf32> -> vector<32x8xf32>
    %cst_4 = arith.constant dense<0.000000e+00> : vector<32x64xf32>
    %5 = tpu.matmul %4, %2, %cst_4 {dimension_numbers = #tpu.dot_dimension_numbers<[1], [0], [0], [1], [0, 0, 1, 1], [], []>} : vector<32x8xf32>, vector<8x64xf32>, vector<32x64xf32> -> vector<32x64xf32>
    %6 = vector.broadcast %3 : vector<1x64xf32> to vector<32x64xf32>
    %7 = arith.addf %5, %6 : vector<32x64xf32>
    %cst_5 = arith.constant 0.000000e+00 : f32
    %8 = vector.broadcast %cst_5 : f32 to vector<32x64xf32>
    %9 = arith.maximumf %7, %8 : vector<32x64xf32>
    %c256 = arith.constant 256 : index
    %c0_6 = arith.constant 0 : index
    %10 = vector.load %arg2[%c256, %c0_6] : memref<360x128xf32, #tpu.memory_space<vmem>>, vector<64x4xf32>
    %c320 = arith.constant 320 : index
    %c0_7 = arith.constant 0 : index
    %11 = vector.load %arg2[%c320, %c0_7] : memref<360x128xf32, #tpu.memory_space<vmem>>, vector<1x4xf32>
    %cst_8 = arith.constant dense<0.000000e+00> : vector<32x4xf32>
    %12 = tpu.matmul %9, %10, %cst_8 {dimension_numbers = #tpu.dot_dimension_numbers<[1], [0], [0], [1], [0, 0, 1, 1], [], []>} : vector<32x64xf32>, vector<64x4xf32>, vector<32x4xf32> -> vector<32x4xf32>
    %cst_9 = arith.constant dense<0.000000e+00> : vector<32x4xf32>
    %13 = tpu.matmul %0, %12, %cst_9 {dimension_numbers = #tpu.dot_dimension_numbers<[1], [0], [0], [1], [0, 0, 1, 1], [], []>} : vector<32x32xf32>, vector<32x4xf32>, vector<32x4xf32> -> vector<32x4xf32>
    %14 = vector.broadcast %11 : vector<1x4xf32> to vector<32x4xf32>
    %15 = arith.addf %13, %14 : vector<32x4xf32>
    %c0_10 = arith.constant 0 : index
    %c0_11 = arith.constant 0 : index
    %16 = vector.load %arg2[%c0_10, %c0_11] : memref<360x128xf32, #tpu.memory_space<vmem>>, vector<16x1xf32>
    %17 = arith.fptosi %16 : vector<16x1xf32> to vector<16x1xi32>
    %18 = tpu.iota {dimensions = array<i32: 1>} : vector<16x32xi32>
    %19 = vector.broadcast %17 : vector<16x1xi32> to vector<16x32xi32>
    %20 = arith.cmpi eq, %18, %19 : vector<16x32xi32>
    %21 = arith.extui %20 : vector<16x32xi1> to vector<16x32xi32>
    %22 = arith.sitofp %21 : vector<16x32xi32> to vector<16x32xf32>
    %cst_12 = arith.constant dense<0.000000e+00> : vector<16x4xf32>
    %23 = tpu.matmul %22, %15, %cst_12 {dimension_numbers = #tpu.dot_dimension_numbers<[1], [0], [0], [1], [0, 0, 1, 1], [], []>} : vector<16x32xf32>, vector<32x4xf32>, vector<16x4xf32> -> vector<16x4xf32>
    %c16 = arith.constant 16 : index
    %c0_13 = arith.constant 0 : index
    %24 = vector.load %arg2[%c16, %c0_13] : memref<360x128xf32, #tpu.memory_space<vmem>>, vector<32x2xf32>
    %cst_14 = arith.constant dense<0.000000e+00> : vector<16x2xf32>
    %25 = tpu.matmul %22, %24, %cst_14 {dimension_numbers = #tpu.dot_dimension_numbers<[1], [0], [0], [1], [0, 0, 1, 1], [], []>} : vector<16x32xf32>, vector<32x2xf32>, vector<16x2xf32> -> vector<16x2xf32>
    %26 = vector.extract_strided_slice %25 {offsets = [0, 0], sizes = [16, 1], strides = [1, 1]} : vector<16x2xf32> to vector<16x1xf32>
    %27 = vector.extract_strided_slice %25 {offsets = [0, 1], sizes = [16, 1], strides = [1, 1]} : vector<16x2xf32> to vector<16x1xf32>
    %c80 = arith.constant 80 : index
    %c0_15 = arith.constant 0 : index
    %28 = vector.load %arg2[%c80, %c0_15] : memref<360x128xf32, #tpu.memory_space<vmem>>, vector<16x8xf32>
    %c96 = arith.constant 96 : index
    %c0_16 = arith.constant 0 : index
    %29 = vector.load %arg2[%c96, %c0_16] : memref<360x128xf32, #tpu.memory_space<vmem>>, vector<8x16xf32>
    %cst_17 = arith.constant dense<0.000000e+00> : vector<16x16xf32>
    %30 = tpu.matmul %28, %29, %cst_17 {dimension_numbers = #tpu.dot_dimension_numbers<[1], [0], [0], [1], [0, 0, 1, 1], [], []>} : vector<16x8xf32>, vector<8x16xf32>, vector<16x16xf32> -> vector<16x16xf32>
    %c104 = arith.constant 104 : index
    %c0_18 = arith.constant 0 : index
    %31 = vector.load %arg2[%c104, %c0_18] : memref<360x128xf32, #tpu.memory_space<vmem>>, vector<1x16xf32>
    %32 = vector.broadcast %31 : vector<1x16xf32> to vector<16x16xf32>
    %33 = arith.addf %30, %32 : vector<16x16xf32>
    %c112 = arith.constant 112 : index
    %c0_19 = arith.constant 0 : index
    %34 = vector.load %arg2[%c112, %c0_19] : memref<360x128xf32, #tpu.memory_space<vmem>>, vector<16x16xf32>
    %cst_20 = arith.constant dense<0.000000e+00> : vector<16x16xf32>
    %35 = tpu.matmul %33, %34, %cst_20 {dimension_numbers = #tpu.dot_dimension_numbers<[1], [0], [0], [1], [0, 0, 1, 1], [], []>} : vector<16x16xf32>, vector<16x16xf32>, vector<16x16xf32> -> vector<16x16xf32>
    %c128 = arith.constant 128 : index
    %c0_21 = arith.constant 0 : index
    %36 = vector.load %arg2[%c128, %c0_21] : memref<360x128xf32, #tpu.memory_space<vmem>>, vector<16x6xf32>
    %c144 = arith.constant 144 : index
    %c0_22 = arith.constant 0 : index
    %37 = vector.load %arg2[%c144, %c0_22] : memref<360x128xf32, #tpu.memory_space<vmem>>, vector<6x8xf32>
    %cst_23 = arith.constant dense<0.000000e+00> : vector<16x8xf32>
    %38 = tpu.matmul %36, %37, %cst_23 {dimension_numbers = #tpu.dot_dimension_numbers<[1], [0], [0], [1], [0, 0, 1, 1], [], []>} : vector<16x6xf32>, vector<6x8xf32>, vector<16x8xf32> -> vector<16x8xf32>
    %c152 = arith.constant 152 : index
    %c0_24 = arith.constant 0 : index
    %39 = vector.load %arg2[%c152, %c0_24] : memref<360x128xf32, #tpu.memory_space<vmem>>, vector<1x8xf32>
    %40 = vector.broadcast %39 : vector<1x8xf32> to vector<16x8xf32>
    %41 = arith.addf %38, %40 : vector<16x8xf32>
    %c160 = arith.constant 160 : index
    %c0_25 = arith.constant 0 : index
    %42 = vector.load %arg2[%c160, %c0_25] : memref<360x128xf32, #tpu.memory_space<vmem>>, vector<8x16xf32>
    %cst_26 = arith.constant dense<0.000000e+00> : vector<16x16xf32>
    %43 = tpu.matmul %41, %42, %cst_26 {dimension_numbers = #tpu.dot_dimension_numbers<[1], [0], [0], [1], [0, 0, 1, 1], [], []>} : vector<16x8xf32>, vector<8x16xf32>, vector<16x16xf32> -> vector<16x16xf32>
    %44 = arith.addf %35, %43 : vector<16x16xf32>
    %c168 = arith.constant 168 : index
    %c0_27 = arith.constant 0 : index
    %45 = vector.load %arg2[%c168, %c0_27] : memref<360x128xf32, #tpu.memory_space<vmem>>, vector<16x4xf32>
    %c184 = arith.constant 184 : index
    %c0_28 = arith.constant 0 : index
    %46 = vector.load %arg2[%c184, %c0_28] : memref<360x128xf32, #tpu.memory_space<vmem>>, vector<4x8xf32>
    %cst_29 = arith.constant dense<0.000000e+00> : vector<16x8xf32>
    %47 = tpu.matmul %45, %46, %cst_29 {dimension_numbers = #tpu.dot_dimension_numbers<[1], [0], [0], [1], [0, 0, 1, 1], [], []>} : vector<16x4xf32>, vector<4x8xf32>, vector<16x8xf32> -> vector<16x8xf32>
    %c192 = arith.constant 192 : index
    %c0_30 = arith.constant 0 : index
    %48 = vector.load %arg2[%c192, %c0_30] : memref<360x128xf32, #tpu.memory_space<vmem>>, vector<1x8xf32>
    %49 = vector.broadcast %48 : vector<1x8xf32> to vector<16x8xf32>
    %50 = arith.addf %47, %49 : vector<16x8xf32>
    %c200 = arith.constant 200 : index
    %c0_31 = arith.constant 0 : index
    %51 = vector.load %arg2[%c200, %c0_31] : memref<360x128xf32, #tpu.memory_space<vmem>>, vector<8x16xf32>
    %cst_32 = arith.constant dense<0.000000e+00> : vector<16x16xf32>
    %52 = tpu.matmul %50, %51, %cst_32 {dimension_numbers = #tpu.dot_dimension_numbers<[1], [0], [0], [1], [0, 0, 1, 1], [], []>} : vector<16x8xf32>, vector<8x16xf32>, vector<16x16xf32> -> vector<16x16xf32>
    %53 = arith.addf %44, %52 : vector<16x16xf32>
    %c0_33 = arith.constant 0 : index
    %c0_34 = arith.constant 0 : index
    %54 = vector.load %arg1[%c0_33, %c0_34] : memref<16x16xf32, #tpu.memory_space<vmem>>, vector<16x16xf32>
    %cst_35 = arith.constant dense<0.000000e+00> : vector<16x16xf32>
    %55 = tpu.matmul %54, %53, %cst_35 {dimension_numbers = #tpu.dot_dimension_numbers<[1], [0], [0], [1], [0, 0, 1, 1], [], []>} : vector<16x16xf32>, vector<16x16xf32>, vector<16x16xf32> -> vector<16x16xf32>
    %c208 = arith.constant 208 : index
    %c0_36 = arith.constant 0 : index
    %56 = vector.load %arg2[%c208, %c0_36] : memref<360x128xf32, #tpu.memory_space<vmem>>, vector<1x16xf32>
    %57 = vector.broadcast %56 : vector<1x16xf32> to vector<16x16xf32>
    %58 = arith.addf %55, %57 : vector<16x16xf32>
    %cst_37 = arith.constant 0.000000e+00 : f32
    %59 = vector.broadcast %cst_37 : f32 to vector<16x16xf32>
    %60 = arith.maximumf %58, %59 : vector<16x16xf32>
    %c216 = arith.constant 216 : index
    %c0_38 = arith.constant 0 : index
    %61 = vector.load %arg2[%c216, %c0_38] : memref<360x128xf32, #tpu.memory_space<vmem>>, vector<16x4xf32>
    %c232 = arith.constant 232 : index
    %c0_39 = arith.constant 0 : index
    %62 = vector.load %arg2[%c232, %c0_39] : memref<360x128xf32, #tpu.memory_space<vmem>>, vector<1x4xf32>
    %cst_40 = arith.constant dense<0.000000e+00> : vector<16x4xf32>
    %63 = tpu.matmul %60, %61, %cst_40 {dimension_numbers = #tpu.dot_dimension_numbers<[1], [0], [0], [1], [0, 0, 1, 1], [], []>} : vector<16x16xf32>, vector<16x4xf32>, vector<16x4xf32> -> vector<16x4xf32>
    %cst_41 = arith.constant dense<0.000000e+00> : vector<16x4xf32>
    %64 = tpu.matmul %54, %63, %cst_41 {dimension_numbers = #tpu.dot_dimension_numbers<[1], [0], [0], [1], [0, 0, 1, 1], [], []>} : vector<16x16xf32>, vector<16x4xf32>, vector<16x4xf32> -> vector<16x4xf32>
    %65 = vector.broadcast %62 : vector<1x4xf32> to vector<16x4xf32>
    %66 = arith.addf %64, %65 : vector<16x4xf32>
    %c328 = arith.constant 328 : index
    %c0_42 = arith.constant 0 : index
    %67 = vector.load %arg2[%c328, %c0_42] : memref<360x128xf32, #tpu.memory_space<vmem>>, vector<1x4xf32>
    %c336 = arith.constant 336 : index
    %c0_43 = arith.constant 0 : index
    %68 = vector.load %arg2[%c336, %c0_43] : memref<360x128xf32, #tpu.memory_space<vmem>>, vector<1x4xf32>
    %cst_44 = arith.constant dense<0.000000e+00> : vector<4xf32>
    %69 = vector.multi_reduction <add>, %23, %cst_44 [0] : vector<16x4xf32> to vector<4xf32>
    %70 = vector.shape_cast %69 : vector<4xf32> to vector<1x4xf32>
    %cst_45 = arith.constant 1.600000e+01 : f32
    %71 = vector.broadcast %cst_45 : f32 to vector<1x4xf32>
    %72 = arith.divf %70, %71 : vector<1x4xf32>
    %73 = vector.broadcast %72 : vector<1x4xf32> to vector<16x4xf32>
    %74 = arith.subf %23, %73 : vector<16x4xf32>
    %75 = arith.mulf %74, %74 : vector<16x4xf32>
    %cst_46 = arith.constant dense<0.000000e+00> : vector<4xf32>
    %76 = vector.multi_reduction <add>, %75, %cst_46 [0] : vector<16x4xf32> to vector<4xf32>
    %77 = vector.shape_cast %76 : vector<4xf32> to vector<1x4xf32>
    %cst_47 = arith.constant 1.600000e+01 : f32
    %78 = vector.broadcast %cst_47 : f32 to vector<1x4xf32>
    %79 = arith.divf %77, %78 : vector<1x4xf32>
    %cst_48 = arith.constant 9.99999974E-6 : f32
    %80 = vector.broadcast %cst_48 : f32 to vector<1x4xf32>
    %81 = arith.addf %79, %80 : vector<1x4xf32>
    %82 = math.rsqrt %81 : vector<1x4xf32>
    %83 = vector.broadcast %82 : vector<1x4xf32> to vector<16x4xf32>
    %84 = arith.mulf %74, %83 : vector<16x4xf32>
    %85 = vector.broadcast %67 : vector<1x4xf32> to vector<16x4xf32>
    %86 = arith.mulf %84, %85 : vector<16x4xf32>
    %87 = vector.broadcast %68 : vector<1x4xf32> to vector<16x4xf32>
    %88 = arith.addf %86, %87 : vector<16x4xf32>
    %c344 = arith.constant 344 : index
    %c0_49 = arith.constant 0 : index
    %89 = vector.load %arg2[%c344, %c0_49] : memref<360x128xf32, #tpu.memory_space<vmem>>, vector<1x4xf32>
    %c352 = arith.constant 352 : index
    %c0_50 = arith.constant 0 : index
    %90 = vector.load %arg2[%c352, %c0_50] : memref<360x128xf32, #tpu.memory_space<vmem>>, vector<1x4xf32>
    %cst_51 = arith.constant dense<0.000000e+00> : vector<4xf32>
    %91 = vector.multi_reduction <add>, %66, %cst_51 [0] : vector<16x4xf32> to vector<4xf32>
    %92 = vector.shape_cast %91 : vector<4xf32> to vector<1x4xf32>
    %cst_52 = arith.constant 1.600000e+01 : f32
    %93 = vector.broadcast %cst_52 : f32 to vector<1x4xf32>
    %94 = arith.divf %92, %93 : vector<1x4xf32>
    %95 = vector.broadcast %94 : vector<1x4xf32> to vector<16x4xf32>
    %96 = arith.subf %66, %95 : vector<16x4xf32>
    %97 = arith.mulf %96, %96 : vector<16x4xf32>
    %cst_53 = arith.constant dense<0.000000e+00> : vector<4xf32>
    %98 = vector.multi_reduction <add>, %97, %cst_53 [0] : vector<16x4xf32> to vector<4xf32>
    %99 = vector.shape_cast %98 : vector<4xf32> to vector<1x4xf32>
    %cst_54 = arith.constant 1.600000e+01 : f32
    %100 = vector.broadcast %cst_54 : f32 to vector<1x4xf32>
    %101 = arith.divf %99, %100 : vector<1x4xf32>
    %cst_55 = arith.constant 9.99999974E-6 : f32
    %102 = vector.broadcast %cst_55 : f32 to vector<1x4xf32>
    %103 = arith.addf %101, %102 : vector<1x4xf32>
    %104 = math.rsqrt %103 : vector<1x4xf32>
    %105 = vector.broadcast %104 : vector<1x4xf32> to vector<16x4xf32>
    %106 = arith.mulf %96, %105 : vector<16x4xf32>
    %107 = vector.broadcast %89 : vector<1x4xf32> to vector<16x4xf32>
    %108 = arith.mulf %106, %107 : vector<16x4xf32>
    %109 = vector.broadcast %90 : vector<1x4xf32> to vector<16x4xf32>
    %110 = arith.addf %108, %109 : vector<16x4xf32>
    %111 = vector.broadcast %26 : vector<16x1xf32> to vector<16x4xf32>
    %112 = arith.mulf %111, %88 : vector<16x4xf32>
    %113 = vector.broadcast %27 : vector<16x1xf32> to vector<16x4xf32>
    %114 = arith.mulf %113, %110 : vector<16x4xf32>
    %115 = arith.addf %112, %114 : vector<16x4xf32>
    %c0_56 = arith.constant 0 : index
    %c0_57 = arith.constant 0 : index
    %116 = vector.load %arg3[%c0_56, %c0_57] : memref<16x4xf32, #tpu.memory_space<vmem>>, vector<16x4xf32>
    tpu.vector_store %arg3[%c0_56, %c0_57], %115 {strides = array<i32>} : memref<16x4xf32, #tpu.memory_space<vmem>>, vector<16x4xf32>,
    return
  }
}

</mosaic_0001>

<llo_original>
// kernel: tpu_custom_call.1
$region0: #{tpu_custom_call.1}
  #allocation0 [shape = 'u32[]', space=smem, size = 0x4, offset = 0x4, fixed_abs, tag = 'smem constant byte address 0x4 - core index']
  #allocation1 [shape = 'u32[72,128]{1,0:T(1,128)}', space=vmem, size = 0x9000, scoped, tag = 'internal scratch']
  %s0 = inlined_call_operand.hbm [shape: f32[32,32], index: 0, kind: input, shape index: {}]
  %s1 = inlined_call_operand.hbm [shape: f32[16,16], index: 1, kind: input, shape index: {}]
  %s2 = inlined_call_operand.hbm [shape: f32[360,128], index: 2, kind: input, shape index: {}]
  %s3 = inlined_call_operand.vmem [shape: f32[16,4], index: 3, kind: output, shape index: {}]
  %s4 = sld [smem:[#allocation0]]
  $region34: #{tpu_custom_call.1} parent=0
    _
  %s6 = ssub.s32 1, %s4
  %s7 = scalar_select 0, %s6, %s4
  $region1: #{tpu_custom_call.1} parent=0
    #allocation2 [shape = 'u8[16384]{0}', space=vmem, size = 0x4000, scoped, tag = 'input window, operand 0, single buffered']
    #allocation3 [shape = 's32[1]{0}', space=sflag, size = 0x4, scoped, tag = 'scoped memory for tpu_custom_call.1']
    #allocation4 [shape = 'u8[8192]{0}', space=vmem, size = 0x2000, scoped, tag = 'input window, operand 1, single buffered']
    #allocation5 [shape = 's32[1]{0}', space=sflag, size = 0x4, scoped, tag = 'scoped memory for tpu_custom_call.1']
    #allocation6 [shape = 'u8[184320]{0}', space=vmem, size = 0x2d000, scoped, tag = 'input window, operand 2, single buffered']
    %8 = vsyncpa [#allocation3], 0
    %9 = vsyncpa [#allocation5], 0
    // Predicated region
    $region2: #{tpu_custom_call.1} parent=1 // pred_check
      _
    $region3: #{tpu_custom_call.1} parent=1 // pred_check_branch
      %11 = sbr.rel (0) target = $region5
    $region4: #{tpu_custom_call.1} parent=1 // pred_region
      %13 = vsyncadd [#allocation3], 0
      %s14 = sshll.u32 %s0, 4
      %s15 = int_to_ptr.hbm [resolvable:$true] %s14
      %s16 = sshll.u32 [#allocation2], 4
      %s17 = int_to_ptr.vmem [resolvable:$true] %s16
      %22 = dma.hbm_to_vmem [thread:$0]  %s15, 512, %s17, [#allocation3], 128, 128, 8
    $region5: #{tpu_custom_call.1} parent=1 // pred_fallthru
      _
    // Predicated region
    $region6: #{tpu_custom_call.1} parent=1 // pred_check
      _
    $region7: #{tpu_custom_call.1} parent=1 // pred_check_branch
      %24 = sbr.rel (0) target = $region9
    $region8: #{tpu_custom_call.1} parent=1 // pred_region
      %26 = vsyncadd [#allocation5], 0
      %s27 = sshll.u32 %s1, 4
      %s28 = int_to_ptr.hbm [resolvable:$true] %s27
      %s29 = sshll.u32 [#allocation4], 4
      %s30 = int_to_ptr.vmem [resolvable:$true] %s29
      %35 = dma.hbm_to_vmem [thread:$0]  %s28, 256, %s30, [#allocation5], 128, 128, 8
    $region9: #{tpu_custom_call.1} parent=1 // pred_fallthru
      _
    // Predicated region
    $region10: #{tpu_custom_call.1} parent=1 // pred_check
      _
    $region11: #{tpu_custom_call.1} parent=1 // pred_check_branch
      %37 = sbr.rel (0) target = $region13
    $region12: #{tpu_custom_call.1} parent=1 // pred_region
      %39 = vsyncadd [#allocation5], 0
      %s40 = sshll.u32 %s2, 4
      %s41 = int_to_ptr.hbm [resolvable:$true] %s40
      %s42 = sshll.u32 [#allocation6], 4
      %s43 = int_to_ptr.vmem [resolvable:$true] %s42
      %48 = dma.hbm_to_vmem [thread:$0]  %s41, 5760, %s43, [#allocation5], 128, 128, 8
    $region13: #{tpu_custom_call.1} parent=1 // pred_fallthru
      _
    // Predicated region
    $region14: #{tpu_custom_call.1} parent=1 // pred_check
      _
    $region15: #{tpu_custom_call.1} parent=1 // pred_check_branch
      %50 = sbr.rel (0) target = $region17
    $region16: #{tpu_custom_call.1} parent=1 // pred_region
      %52 = dma.done [#allocation3], 512
    $region17: #{tpu_custom_call.1} parent=1 // pred_fallthru
      _
    // Predicated region
    $region18: #{tpu_custom_call.1} parent=1 // pred_check
      _
    $region19: #{tpu_custom_call.1} parent=1 // pred_check_branch
      %54 = sbr.rel (0) target = $region21
    $region20: #{tpu_custom_call.1} parent=1 // pred_region
      %56 = dma.done [#allocation5], 256
    $region21: #{tpu_custom_call.1} parent=1 // pred_fallthru
      _
    // Predicated region
    $region22: #{tpu_custom_call.1} parent=1 // pred_check
      _
    $region23: #{tpu_custom_call.1} parent=1 // pred_check_branch
      %58 = sbr.rel (0) target = $region25
    $region24: #{tpu_custom_call.1} parent=1 // pred_region
      %60 = dma.done [#allocation5], 5760
    $region25: #{tpu_custom_call.1} parent=1 // pred_fallthru
      _
    %v61 = vld [vmem:[#allocation2] sm:$0xff]
    %v62 = vld [vmem:[#allocation2 + $0x8] sm:$0xff]
    %v63 = vld [vmem:[#allocation2 + $0x10] sm:$0xff]
    %v64 = vld [vmem:[#allocation2 + $0x18] sm:$0xff]
    %v65 = vld [vmem:[#allocation6 + $0x30] sm:$0xff]
    %v66 = vld [vmem:[#allocation6 + $0x38] sm:$0xff]
    %v67 = vld [vmem:[#allocation6 + $0x40] sm:$0xff]
    %v68 = vld [vmem:[#allocation6 + $0x48] sm:$0xff]
    %v69 = vld [vmem:[#allocation6 + $0xf0] sm:$0xff]
    %v70 = vld [vmem:[#allocation6 + $0xf8] sm:$0x1]
    %vm71 = vcmask 261120
    %v73 = vsel %vm71, %v61, 0
    %v76 = vsel %vm71, %v62, 0
    %v79 = vsel %vm71, %v63, 0
    %v82 = vsel %vm71, %v64, 0
    %84 = vmatpush.msra.mxu0 0.0
    %85 = vmatpush.msra.mxu0 0.0
    %86 = vmatpush.msra.mxu0 0.0
    %87 = vmatpush.msra.mxu0 0.0
    %88 = vmatpush.msra.mxu0 0.0
    %89 = vmatpush.msra.mxu0 0.0
    %90 = vmatpush.msra.mxu0 0.0
    %91 = vmatpush.msra.mxu0 0.0
    %92 = vmatpush.msra.mxu0 0.0
    %93 = vmatpush.msra.mxu0 0.0
    %94 = vmatpush.msra.mxu0 0.0
    %95 = vmatpush.msra.mxu0 0.0
    %96 = vmatpush.msra.mxu0 %v68
    %97 = vmatpush.msra.mxu0 %v67
    %98 = vmatpush.msra.mxu0 %v66
    %99 = vmatpush.msra.mxu0 %v65
    %100 = vmatmul.f32.gmra.mxu0 %v73
    %v101 = vpop.f32.mrf.mxu0
    %v102 = vadd.f32 0.0, %v101
    %103 = vmatmul.f32.gmra.mxu0 %v76
    %v104 = vpop.f32.mrf.mxu0
    %v105 = vadd.f32 0.0, %v104
    %106 = vmatmul.f32.gmra.mxu0 %v79
    %v107 = vpop.f32.mrf.mxu0
    %v108 = vadd.f32 0.0, %v107
    %109 = vmatmul.f32.gmra.mxu0 %v82
    %v110 = vpop.f32.mrf.mxu0
    %v111 = vadd.f32 0.0, %v110
    %112 = vdwg.mxu0
    %v113 = vperm.slane %v70, 0
    %vm114 = vcmask 64512
    %v116 = vsel %vm114, %v102, 0
    %v119 = vsel %vm114, %v105, 0
    %v122 = vsel %vm114, %v108, 0
    %v125 = vsel %vm114, %v111, 0
    %127 = vmatpush.msra.mxu0 0.0
    %128 = vmatpush.msra.mxu0 0.0
    %129 = vmatpush.msra.mxu0 0.0
    %130 = vmatpush.msra.mxu0 0.0
    %131 = vmatpush.msra.mxu0 0.0
    %132 = vmatpush.msra.mxu0 0.0
    %133 = vmatpush.msra.mxu0 0.0
    %134 = vmatpush.msra.mxu0 0.0
    %135 = vmatpush.msra.mxu0 0.0
    %136 = vmatpush.msra.mxu0 0.0
    %137 = vmatpush.msra.mxu0 0.0
    %138 = vmatpush.msra.mxu0 0.0
    %139 = vmatpush.msra.mxu0 0.0
    %140 = vmatpush.msra.mxu0 0.0
    %141 = vmatpush.msra.mxu0 0.0
    %142 = vmatpush.msra.mxu0 %v69
    %143 = vmatmul.f32.gmra.mxu0 %v116
    %v144 = vpop.f32.mrf.mxu0
    %v145 = vadd.f32 %v113, %v144
    %146 = vmatmul.f32.gmra.mxu0 %v119
    %v147 = vpop.f32.mrf.mxu0
    %v148 = vadd.f32 %v113, %v147
    %149 = vmatmul.f32.gmra.mxu0 %v122
    %v150 = vpop.f32.mrf.mxu0
    %v151 = vadd.f32 %v113, %v150
    %152 = vmatmul.f32.gmra.mxu0 %v125
    %v153 = vpop.f32.mrf.mxu0
    %v154 = vadd.f32 %v113, %v153
    %155 = vdwg.mxu0
    %v156 = vmax.f32 %v145, 0.0
    %v157 = vmax.f32 %v148, 0.0
    %v158 = vmax.f32 %v151, 0.0
    %v159 = vmax.f32 %v154, 0.0
    %v160 = vld [vmem:[#allocation6 + $0x100] sm:$0xff]
    %v161 = vld [vmem:[#allocation6 + $0x108] sm:$0xff]
    %v162 = vld [vmem:[#allocation6 + $0x110] sm:$0xff]
    %v163 = vld [vmem:[#allocation6 + $0x118] sm:$0xff]
    %v164 = vld [vmem:[#allocation6 + $0x120] sm:$0xff]
    %v165 = vld [vmem:[#allocation6 + $0x128] sm:$0xff]
    %v166 = vld [vmem:[#allocation6 + $0x130] sm:$0xff]
    %v167 = vld [vmem:[#allocation6 + $0x138] sm:$0xff]
    %v168 = vld [vmem:[#allocation6 + $0x140] sm:$0x1]
    %vm169 = vcmask 523264
    %v171 = vsel %vm169, %v156, 0
    %v174 = vsel %vm169, %v157, 0
    %v177 = vsel %vm169, %v158, 0
    %v180 = vsel %vm169, %v159, 0
    %182 = vmatpush.msra.mxu0 0.0
    %183 = vmatpush.msra.mxu0 0.0
    %184 = vmatpush.msra.mxu0 0.0
    %185 = vmatpush.msra.mxu0 0.0
    %186 = vmatpush.msra.mxu0 0.0
    %187 = vmatpush.msra.mxu0 0.0
    %188 = vmatpush.msra.mxu0 0.0
    %189 = vmatpush.msra.mxu0 0.0
    %190 = vmatpush.msra.mxu0 %v167
    %191 = vmatpush.msra.mxu0 %v166
    %192 = vmatpush.msra.mxu0 %v165
    %193 = vmatpush.msra.mxu0 %v164
    %194 = vmatpush.msra.mxu0 %v163
    %195 = vmatpush.msra.mxu0 %v162
    %196 = vmatpush.msra.mxu0 %v161
    %197 = vmatpush.msra.mxu0 %v160
    %198 = vmatmul.f32.gmra.mxu0 %v171
    %v199 = vpop.f32.mrf.mxu0
    %v200 = vadd.f32 0.0, %v199
    %201 = vmatmul.f32.gmra.mxu0 %v174
    %v202 = vpop.f32.mrf.mxu0
    %v203 = vadd.f32 0.0, %v202
    %204 = vmatmul.f32.gmra.mxu0 %v177
    %v205 = vpop.f32.mrf.mxu0
    %v206 = vadd.f32 0.0, %v205
    %207 = vmatmul.f32.gmra.mxu0 %v180
    %v208 = vpop.f32.mrf.mxu0
    %v209 = vadd.f32 0.0, %v208
    %210 = vdwg.mxu0
    %v211 = vperm.slane %v168, 0
    %212 = vmatpush.msra.mxu0 0.0
    %213 = vmatpush.msra.mxu0 0.0
    %214 = vmatpush.msra.mxu0 0.0
    %215 = vmatpush.msra.mxu0 0.0
    %216 = vmatpush.msra.mxu0 0.0
    %217 = vmatpush.msra.mxu0 0.0
    %218 = vmatpush.msra.mxu0 0.0
    %219 = vmatpush.msra.mxu0 0.0
    %220 = vmatpush.msra.mxu0 0.0
    %221 = vmatpush.msra.mxu0 0.0
    %222 = vmatpush.msra.mxu0 0.0
    %223 = vmatpush.msra.mxu0 0.0
    %224 = vmatpush.msra.mxu0 %v209
    %225 = vmatpush.msra.mxu0 %v206
    %226 = vmatpush.msra.mxu0 %v203
    %227 = vmatpush.msra.mxu0 %v200
    %228 = vmatmul.f32.gmra.mxu0 %v73
    %v229 = vpop.f32.mrf.mxu0
    %v230 = vadd.f32 %v211, %v229
    %231 = vmatmul.f32.gmra.mxu0 %v76
    %v232 = vpop.f32.mrf.mxu0
    %v233 = vadd.f32 %v211, %v232
    %234 = vmatmul.f32.gmra.mxu0 %v79
    %v235 = vpop.f32.mrf.mxu0
    %v236 = vadd.f32 %v211, %v235
    %237 = vmatmul.f32.gmra.mxu0 %v82
    %v238 = vpop.f32.mrf.mxu0
    %v239 = vadd.f32 %v211, %v238
    %240 = vdwg.mxu0
    %v241 = vld [vmem:[#allocation6] sm:$0xff]
    %v242 = vld [vmem:[#allocation6 + $0x8] sm:$0xff]
    %v243 = vcvt.f32.s32.to.zero.pseudo %v241
    %v244 = vcvt.f32.s32.to.zero.pseudo %v242
    %v245 = vlaneseq
    %v246 = vand.u32 %v245, 127
    %247 = vset.pattern.permute.xlu0 0
    %248 = vperm.xlu0 %247, %v243
    %v249 = vpop.permute.xlu0 %248
    %250 = vset.pattern.permute.xlu0 0
    %251 = vperm.xlu0 %250, %v244
    %v252 = vpop.permute.xlu0 %251
    %vm253 = vcmp.eq.s32.totalorder %v246, %v249
    %vm254 = vcmp.eq.s32.totalorder %v246, %v252
    %v255 = vsel %vm253, 1, 0
    %v256 = vsel %vm254, 1, 0
    %v257 = vcvt.s32.f32 %v255
    %v258 = vcvt.s32.f32 %v256
    %v260 = vsel %vm71, %v257, 0
    %v263 = vsel %vm71, %v258, 0
    %265 = vmatpush.msra.mxu0 0.0
    %266 = vmatpush.msra.mxu0 0.0
    %267 = vmatpush.msra.mxu0 0.0
    %268 = vmatpush.msra.mxu0 0.0
    %269 = vmatpush.msra.mxu0 0.0
    %270 = vmatpush.msra.mxu0 0.0
    %271 = vmatpush.msra.mxu0 0.0
    %272 = vmatpush.msra.mxu0 0.0
    %273 = vmatpush.msra.mxu0 0.0
    %274 = vmatpush.msra.mxu0 0.0
    %275 = vmatpush.msra.mxu0 0.0
    %276 = vmatpush.msra.mxu0 0.0
    %277 = vmatpush.msra.mxu0 %v239
    %278 = vmatpush.msra.mxu0 %v236
    %279 = vmatpush.msra.mxu0 %v233
    %280 = vmatpush.msra.mxu0 %v230
    %281 = vmatmul.f32.gmra.mxu0 %v260
    %v282 = vpop.f32.mrf.mxu0
    %v283 = vadd.f32 0.0, %v282
    %284 = vmatmul.f32.gmra.mxu0 %v263
    %v285 = vpop.f32.mrf.mxu0
    %v286 = vadd.f32 0.0, %v285
    %287 = vdwg.mxu0
    %v288 = vld [vmem:[#allocation6 + $0x10] sm:$0xff]
    %v289 = vld [vmem:[#allocation6 + $0x18] sm:$0xff]
    %v290 = vld [vmem:[#allocation6 + $0x20] sm:$0xff]
    %v291 = vld [vmem:[#allocation6 + $0x28] sm:$0xff]
    %292 = vmatpush.msra.mxu0 0.0
    %293 = vmatpush.msra.mxu0 0.0
    %294 = vmatpush.msra.mxu0 0.0
    %295 = vmatpush.msra.mxu0 0.0
    %296 = vmatpush.msra.mxu0 0.0
    %297 = vmatpush.msra.mxu0 0.0
    %298 = vmatpush.msra.mxu0 0.0
    %299 = vmatpush.msra.mxu0 0.0
    %300 = vmatpush.msra.mxu0 0.0
    %301 = vmatpush.msra.mxu0 0.0
    %302 = vmatpush.msra.mxu0 0.0
    %303 = vmatpush.msra.mxu0 0.0
    %304 = vmatpush.msra.mxu0 %v291
    %305 = vmatpush.msra.mxu0 %v290
    %306 = vmatpush.msra.mxu0 %v289
    %307 = vmatpush.msra.mxu0 %v288
    %308 = vmatmul.f32.gmra.mxu0 %v260
    %v309 = vpop.f32.mrf.mxu0
    %v310 = vadd.f32 0.0, %v309
    %311 = vmatmul.f32.gmra.mxu0 %v263
    %v312 = vpop.f32.mrf.mxu0
    %v313 = vadd.f32 0.0, %v312
    %314 = vdwg.mxu0
    %v315 = vld [vmem:[#allocation6 + $0x50] sm:$0xff]
    %v316 = vld [vmem:[#allocation6 + $0x58] sm:$0xff]
    %v317 = vld [vmem:[#allocation6 + $0x60] sm:$0xff]
    %v318 = vld [vmem:[#allocation6 + $0x68] sm:$0x1]
    %v319 = vperm.slane %v318, 0
    %v321 = vsel %vm114, %v315, 0
    %v324 = vsel %vm114, %v316, 0
    %326 = vmatpush.msra.mxu0 0.0
    %327 = vmatpush.msra.mxu0 0.0
    %328 = vmatpush.msra.mxu0 0.0
    %329 = vmatpush.msra.mxu0 0.0
    %330 = vmatpush.msra.mxu0 0.0
    %331 = vmatpush.msra.mxu0 0.0
    %332 = vmatpush.msra.mxu0 0.0
    %333 = vmatpush.msra.mxu0 0.0
    %334 = vmatpush.msra.mxu0 0.0
    %335 = vmatpush.msra.mxu0 0.0
    %336 = vmatpush.msra.mxu0 0.0
    %337 = vmatpush.msra.mxu0 0.0
    %338 = vmatpush.msra.mxu0 0.0
    %339 = vmatpush.msra.mxu0 0.0
    %340 = vmatpush.msra.mxu0 0.0
    %341 = vmatpush.msra.mxu0 %v317
    %342 = vmatmul.f32.gmra.mxu0 %v321
    %v343 = vpop.f32.mrf.mxu0
    %v344 = vadd.f32 %v319, %v343
    %345 = vmatmul.f32.gmra.mxu0 %v324
    %v346 = vpop.f32.mrf.mxu0
    %v347 = vadd.f32 %v319, %v346
    %348 = vdwg.mxu0
    %v349 = vld [vmem:[#allocation6 + $0x70] sm:$0xff]
    %v350 = vld [vmem:[#allocation6 + $0x78] sm:$0xff]
    %v351 = vld [vmem:[#allocation6 + $0x80] sm:$0xff]
    %v352 = vld [vmem:[#allocation6 + $0x88] sm:$0xff]
    %v353 = vld [vmem:[#allocation6 + $0x90] sm:$0x3f]
    %v354 = vld [vmem:[#allocation6 + $0x98] sm:$0x1]
    %v355 = vperm.slane %v354, 0
    %vm356 = vcmask 48128
    %v358 = vsel %vm356, %v351, 0
    %v361 = vsel %vm356, %v352, 0
    %vm363 = vcmask 1045504
    %v365 = vsel %vm363, %v353, 0
    %367 = vmatpush.msra.mxu0 0.0
    %368 = vmatpush.msra.mxu0 0.0
    %369 = vmatpush.msra.mxu0 0.0
    %370 = vmatpush.msra.mxu0 0.0
    %371 = vmatpush.msra.mxu0 0.0
    %372 = vmatpush.msra.mxu0 0.0
    %373 = vmatpush.msra.mxu0 0.0
    %374 = vmatpush.msra.mxu0 0.0
    %375 = vmatpush.msra.mxu0 0.0
    %376 = vmatpush.msra.mxu0 0.0
    %377 = vmatpush.msra.mxu0 0.0
    %378 = vmatpush.msra.mxu0 0.0
    %379 = vmatpush.msra.mxu0 0.0
    %380 = vmatpush.msra.mxu0 0.0
    %381 = vmatpush.msra.mxu0 0.0
    %382 = vmatpush.msra.mxu0 %v365
    %383 = vmatmul.f32.gmra.mxu0 %v358
    %v384 = vpop.f32.mrf.mxu0
    %v385 = vadd.f32 %v355, %v384
    %386 = vmatmul.f32.gmra.mxu0 %v361
    %v387 = vpop.f32.mrf.mxu0
    %v388 = vadd.f32 %v355, %v387
    %389 = vdwg.mxu0
    %v390 = vld [vmem:[#allocation6 + $0xa0] sm:$0xff]
    %v392 = vsel %vm114, %v385, 0
    %v395 = vsel %vm114, %v388, 0
    %397 = vmatpush.msra.mxu0 0.0
    %398 = vmatpush.msra.mxu0 0.0
    %399 = vmatpush.msra.mxu0 0.0
    %400 = vmatpush.msra.mxu0 0.0
    %401 = vmatpush.msra.mxu0 0.0
    %402 = vmatpush.msra.mxu0 0.0
    %403 = vmatpush.msra.mxu0 0.0
    %404 = vmatpush.msra.mxu0 0.0
    %405 = vmatpush.msra.mxu0 0.0
    %406 = vmatpush.msra.mxu0 0.0
    %407 = vmatpush.msra.mxu0 0.0
    %408 = vmatpush.msra.mxu0 0.0
    %409 = vmatpush.msra.mxu0 0.0
    %410 = vmatpush.msra.mxu0 0.0
    %411 = vmatpush.msra.mxu0 0.0
    %412 = vmatpush.msra.mxu0 %v390
    %413 = vmatmul.f32.gmra.mxu0 %v392
    %v414 = vpop.f32.mrf.mxu0
    %v415 = vadd.f32 0.0, %v414
    %416 = vmatmul.f32.gmra.mxu0 %v395
    %v417 = vpop.f32.mrf.mxu0
    %v418 = vadd.f32 0.0, %v417
    %419 = vdwg.mxu0
    %vm420 = vcmask 130048
    %v422 = vsel %vm420, %v344, 0
    %v425 = vsel %vm420, %v347, 0
    %427 = vmatpush.msra.mxu0 0.0
    %428 = vmatpush.msra.mxu0 0.0
    %429 = vmatpush.msra.mxu0 0.0
    %430 = vmatpush.msra.mxu0 0.0
    %431 = vmatpush.msra.mxu0 0.0
    %432 = vmatpush.msra.mxu0 0.0
    %433 = vmatpush.msra.mxu0 0.0
    %434 = vmatpush.msra.mxu0 0.0
    %435 = vmatpush.msra.mxu0 0.0
    %436 = vmatpush.msra.mxu0 0.0
    %437 = vmatpush.msra.mxu0 0.0
    %438 = vmatpush.msra.mxu0 0.0
    %439 = vmatpush.msra.mxu0 0.0
    %440 = vmatpush.msra.mxu0 0.0
    %441 = vmatpush.msra.mxu0 %v350
    %442 = vmatpush.msra.mxu0 %v349
    %443 = vmatmul.f32.gmra.mxu0 %v422
    %v444 = vpop.f32.mrf.mxu0
    %v445 = vadd.f32 %v415, %v444
    %446 = vmatmul.f32.gmra.mxu0 %v425
    %v447 = vpop.f32.mrf.mxu0
    %v448 = vadd.f32 %v418, %v447
    %449 = vdwg.mxu0
    %v450 = vld [vmem:[#allocation6 + $0xa8] sm:$0xff]
    %v451 = vld [vmem:[#allocation6 + $0xb0] sm:$0xff]
    %v452 = vld [vmem:[#allocation6 + $0xb8] sm:$0xf]
    %v453 = vld [vmem:[#allocation6 + $0xc0] sm:$0x1]
    %v454 = vperm.slane %v453, 0
    %vm455 = vcmask 31744
    %v457 = vsel %vm455, %v450, 0
    %v460 = vsel %vm455, %v451, 0
    %vm462 = vcmask 1043456
    %v464 = vsel %vm462, %v452, 0
    %466 = vmatpush.msra.mxu0 0.0
    %467 = vmatpush.msra.mxu0 0.0
    %468 = vmatpush.msra.mxu0 0.0
    %469 = vmatpush.msra.mxu0 0.0
    %470 = vmatpush.msra.mxu0 0.0
    %471 = vmatpush.msra.mxu0 0.0
    %472 = vmatpush.msra.mxu0 0.0
    %473 = vmatpush.msra.mxu0 0.0
    %474 = vmatpush.msra.mxu0 0.0
    %475 = vmatpush.msra.mxu0 0.0
    %476 = vmatpush.msra.mxu0 0.0
    %477 = vmatpush.msra.mxu0 0.0
    %478 = vmatpush.msra.mxu0 0.0
    %479 = vmatpush.msra.mxu0 0.0
    %480 = vmatpush.msra.mxu0 0.0
    %481 = vmatpush.msra.mxu0 %v464
    %482 = vmatmul.f32.gmra.mxu0 %v457
    %v483 = vpop.f32.mrf.mxu0
    %v484 = vadd.f32 %v454, %v483
    %485 = vmatmul.f32.gmra.mxu0 %v460
    %v486 = vpop.f32.mrf.mxu0
    %v487 = vadd.f32 %v454, %v486
    %488 = vdwg.mxu0
    %v489 = vld [vmem:[#allocation6 + $0xc8] sm:$0xff]
    %v491 = vsel %vm114, %v484, 0
    %v494 = vsel %vm114, %v487, 0
    %496 = vmatpush.msra.mxu0 0.0
    %497 = vmatpush.msra.mxu0 0.0
    %498 = vmatpush.msra.mxu0 0.0
    %499 = vmatpush.msra.mxu0 0.0
    %500 = vmatpush.msra.mxu0 0.0
    %501 = vmatpush.msra.mxu0 0.0
    %502 = vmatpush.msra.mxu0 0.0
    %503 = vmatpush.msra.mxu0 0.0
    %504 = vmatpush.msra.mxu0 0.0
    %505 = vmatpush.msra.mxu0 0.0
    %506 = vmatpush.msra.mxu0 0.0
    %507 = vmatpush.msra.mxu0 0.0
    %508 = vmatpush.msra.mxu0 0.0
    %509 = vmatpush.msra.mxu0 0.0
    %510 = vmatpush.msra.mxu0 0.0
    %511 = vmatpush.msra.mxu0 %v489
    %512 = vmatmul.f32.gmra.mxu0 %v491
    %v513 = vpop.f32.mrf.mxu0
    %v514 = vadd.f32 0.0, %v513
    %515 = vmatmul.f32.gmra.mxu0 %v494
    %v516 = vpop.f32.mrf.mxu0
    %v517 = vadd.f32 0.0, %v516
    %518 = vdwg.mxu0
    %v519 = vadd.f32 %v445, %v514
    %v520 = vadd.f32 %v448, %v517
    %v521 = vld [vmem:[#allocation4] sm:$0xff]
    %v522 = vld [vmem:[#allocation4 + $0x8] sm:$0xff]
    %v523 = vld [vmem:[#allocation6 + $0xd0] sm:$0x1]
    %v524 = vperm.slane %v523, 0
    %v526 = vsel %vm420, %v521, 0
    %v529 = vsel %vm420, %v522, 0
    %531 = vmatpush.msra.mxu0 0.0
    %532 = vmatpush.msra.mxu0 0.0
    %533 = vmatpush.msra.mxu0 0.0
    %534 = vmatpush.msra.mxu0 0.0
    %535 = vmatpush.msra.mxu0 0.0
    %536 = vmatpush.msra.mxu0 0.0
    %537 = vmatpush.msra.mxu0 0.0
    %538 = vmatpush.msra.mxu0 0.0
    %539 = vmatpush.msra.mxu0 0.0
    %540 = vmatpush.msra.mxu0 0.0
    %541 = vmatpush.msra.mxu0 0.0
    %542 = vmatpush.msra.mxu0 0.0
    %543 = vmatpush.msra.mxu0 0.0
    %544 = vmatpush.msra.mxu0 0.0
    %545 = vmatpush.msra.mxu0 %v520
    %546 = vmatpush.msra.mxu0 %v519
    %547 = vmatmul.f32.gmra.mxu0 %v526
    %v548 = vpop.f32.mrf.mxu0
    %v549 = vadd.f32 %v524, %v548
    %550 = vmatmul.f32.gmra.mxu0 %v529
    %v551 = vpop.f32.mrf.mxu0
    %v552 = vadd.f32 %v524, %v551
    %553 = vdwg.mxu0
    %v554 = vmax.f32 %v549, 0.0
    %v555 = vmax.f32 %v552, 0.0
    %v556 = vld [vmem:[#allocation6 + $0xd8] sm:$0xff]
    %v557 = vld [vmem:[#allocation6 + $0xe0] sm:$0xff]
    %v558 = vld [vmem:[#allocation6 + $0xe8] sm:$0x1]
    %v560 = vsel %vm420, %v554, 0
    %v563 = vsel %vm420, %v555, 0
    %565 = vmatpush.msra.mxu0 0.0
    %566 = vmatpush.msra.mxu0 0.0
    %567 = vmatpush.msra.mxu0 0.0
    %568 = vmatpush.msra.mxu0 0.0
    %569 = vmatpush.msra.mxu0 0.0
    %570 = vmatpush.msra.mxu0 0.0
    %571 = vmatpush.msra.mxu0 0.0
    %572 = vmatpush.msra.mxu0 0.0
    %573 = vmatpush.msra.mxu0 0.0
    %574 = vmatpush.msra.mxu0 0.0
    %575 = vmatpush.msra.mxu0 0.0
    %576 = vmatpush.msra.mxu0 0.0
    %577 = vmatpush.msra.mxu0 0.0
    %578 = vmatpush.msra.mxu0 0.0
    %579 = vmatpush.msra.mxu0 %v557
    %580 = vmatpush.msra.mxu0 %v556
    %581 = vmatmul.f32.gmra.mxu0 %v560
    %v582 = vpop.f32.mrf.mxu0
    %v583 = vadd.f32 0.0, %v582
    %584 = vmatmul.f32.gmra.mxu0 %v563
    %v585 = vpop.f32.mrf.mxu0
    %v586 = vadd.f32 0.0, %v585
    %587 = vdwg.mxu0
    %v588 = vperm.slane %v558, 0
    %589 = vmatpush.msra.mxu0 0.0
    %590 = vmatpush.msra.mxu0 0.0
    %591 = vmatpush.msra.mxu0 0.0
    %592 = vmatpush.msra.mxu0 0.0
    %593 = vmatpush.msra.mxu0 0.0
    %594 = vmatpush.msra.mxu0 0.0
    %595 = vmatpush.msra.mxu0 0.0
    %596 = vmatpush.msra.mxu0 0.0
    %597 = vmatpush.msra.mxu0 0.0
    %598 = vmatpush.msra.mxu0 0.0
    %599 = vmatpush.msra.mxu0 0.0
    %600 = vmatpush.msra.mxu0 0.0
    %601 = vmatpush.msra.mxu0 0.0
    %602 = vmatpush.msra.mxu0 0.0
    %603 = vmatpush.msra.mxu0 %v586
    %604 = vmatpush.msra.mxu0 %v583
    %605 = vmatmul.f32.gmra.mxu0 %v526
    %v606 = vpop.f32.mrf.mxu0
    %v607 = vadd.f32 %v588, %v606
    %608 = vmatmul.f32.gmra.mxu0 %v529
    %v609 = vpop.f32.mrf.mxu0
    %v610 = vadd.f32 %v588, %v609
    %611 = vdwg.mxu0
    %v612 = vld [vmem:[#allocation6 + $0x148] sm:$0x1]
    %v613 = vld [vmem:[#allocation6 + $0x150] sm:$0x1]
    %v614 = vsel %vm455, %v283, 0.0
    %v615 = vsel %vm455, %v286, 0.0
    %v616 = vadd.f32 %v614, %v615
    %v617 = vrot.slane %v616, 4
    %v618 = vadd.f32 %v616, %v617
    %v619 = vrot.slane %v618, 2
    %v620 = vadd.f32 %v618, %v619
    %v621 = vrot.slane %v620, 1
    %v622 = vadd.f32 %v620, %v621
    %v623 = vrcp.pop 16.0
    %v624 = vmul.f32 16.0, %v623
    %v625 = vsub.f32 1.0, %v624
    %v626 = vmul.f32 %v623, %v625
    %v627 = vadd.f32 %v623, %v626
    %vm628 = vweird.f32 %v623
    %v629 = vsel %vm628, %v623, %v627
    %v630 = vmul.f32 %v622, %v629
    %v631 = vsub.f32 %v283, %v630
    %v632 = vsub.f32 %v286, %v630
    %v633 = vmul.f32 %v631, %v631
    %v634 = vmul.f32 %v632, %v632
    %v635 = vsel %vm455, %v633, 0.0
    %v636 = vsel %vm455, %v634, 0.0
    %v637 = vadd.f32 %v635, %v636
    %v638 = vrot.slane %v637, 4
    %v639 = vadd.f32 %v637, %v638
    %v640 = vrot.slane %v639, 2
    %v641 = vadd.f32 %v639, %v640
    %v642 = vrot.slane %v641, 1
    %v643 = vadd.f32 %v641, %v642
    %v644 = vmul.f32 %v643, %v629
    %v645 = vadd.f32 %v644, 1e-05
    %v646 = vrsqrt.pop %v645
    %v647 = vmul.f32 %v646, %v645
    %v648 = vmul.f32 %v647, %v646
    %v649 = vmul.f32 0.5, %v648
    %v650 = vsub.f32 1.5, %v649
    %v651 = vmul.f32 %v646, %v650
    %vm652 = vweird.f32 %v645
    %vm653 = vweird.f32 %v646
    %vm654 = vmor %vm652, %vm653
    %v655 = vsel %vm654, %v646, %v651
    %v656 = vmul.f32 %v631, %v655
    %v657 = vmul.f32 %v632, %v655
    %v658 = vperm.slane %v612, 0
    %v659 = vmul.f32 %v656, %v658
    %v660 = vmul.f32 %v657, %v658
    %v661 = vperm.slane %v613, 0
    %v662 = vadd.f32 %v659, %v661
    %v663 = vadd.f32 %v660, %v661
    %v664 = vld [vmem:[#allocation6 + $0x158] sm:$0x1]
    %v665 = vld [vmem:[#allocation6 + $0x160] sm:$0x1]
    %v666 = vsel %vm455, %v607, 0.0
    %v667 = vsel %vm455, %v610, 0.0
    %v668 = vadd.f32 %v666, %v667
    %v669 = vrot.slane %v668, 4
    %v670 = vadd.f32 %v668, %v669
    %v671 = vrot.slane %v670, 2
    %v672 = vadd.f32 %v670, %v671
    %v673 = vrot.slane %v672, 1
    %v674 = vadd.f32 %v672, %v673
    %v675 = vmul.f32 %v674, %v629
    %v676 = vsub.f32 %v607, %v675
    %v677 = vsub.f32 %v610, %v675
    %v678 = vmul.f32 %v676, %v676
    %v679 = vmul.f32 %v677, %v677
    %v680 = vsel %vm455, %v678, 0.0
    %v681 = vsel %vm455, %v679, 0.0
    %v682 = vadd.f32 %v680, %v681
    %v683 = vrot.slane %v682, 4
    %v684 = vadd.f32 %v682, %v683
    %v685 = vrot.slane %v684, 2
    %v686 = vadd.f32 %v684, %v685
    %v687 = vrot.slane %v686, 1
    %v688 = vadd.f32 %v686, %v687
    %v689 = vmul.f32 %v688, %v629
    %v690 = vadd.f32 %v689, 1e-05
    %v691 = vrsqrt.pop %v690
    %v692 = vmul.f32 %v691, %v690
    %v693 = vmul.f32 %v692, %v691
    %v694 = vmul.f32 0.5, %v693
    %v695 = vsub.f32 1.5, %v694
    %v696 = vmul.f32 %v691, %v695
    %vm697 = vweird.f32 %v690
    %vm698 = vweird.f32 %v691
    %vm699 = vmor %vm697, %vm698
    %v700 = vsel %vm699, %v691, %v696
    %v701 = vmul.f32 %v676, %v700
    %v702 = vmul.f32 %v677, %v700
    %v703 = vperm.slane %v664, 0
    %v704 = vmul.f32 %v701, %v703
    %v705 = vmul.f32 %v702, %v703
    %v706 = vperm.slane %v665, 0
    %v707 = vadd.f32 %v704, %v706
    %v708 = vadd.f32 %v705, %v706
    %710 = vset.pattern.permute.xlu0 0
    %711 = vperm.xlu0 %710, %v310
    %v712 = vpop.permute.xlu0 %711
    %715 = vset.pattern.permute.xlu0 0
    %716 = vperm.xlu0 %715, %v313
    %v717 = vpop.permute.xlu0 %716
    %v719 = vmul.f32 %v712, %v662
    %v720 = vmul.f32 %v717, %v663
    %721 = vset.pattern.permute.xlu0 1
    %722 = vperm.xlu0 %721, %v310
    %v723 = vpop.permute.xlu0 %722
    %725 = vset.pattern.permute.xlu0 1
    %726 = vperm.xlu0 %725, %v313
    %v727 = vpop.permute.xlu0 %726
    %v729 = vmul.f32 %v723, %v707
    %v730 = vmul.f32 %v727, %v708
    %v731 = vadd.f32 %v719, %v729
    %v732 = vadd.f32 %v720, %v730
    %733 = vst.msk [vmem:[%s3] sm:$0xff] %vm455, %v731
    %734 = vst.msk [vmem:[%s3 + $0x8] sm:$0xff] %vm455, %v732
    // Predicated region
    $region26: #{tpu_custom_call.1} parent=1 // pred_check
      _
    $region27: #{tpu_custom_call.1} parent=1 // pred_check_branch
      %736 = sbr.rel (0) target = $region29
    $region28: #{tpu_custom_call.1} parent=1 // pred_region
      _
    $region29: #{tpu_custom_call.1} parent=1 // pred_fallthru
      _
    // Predicated region
    $region30: #{tpu_custom_call.1} parent=1 // pred_check
      _
    $region31: #{tpu_custom_call.1} parent=1 // pred_check_branch
      %738 = sbr.rel (0) target = $region33
    $region32: #{tpu_custom_call.1} parent=1 // pred_region
      _
    $region33: #{tpu_custom_call.1} parent=1 // pred_fallthru
      _
    %739 = vsyncpa [#allocation3], 1
    %740 = vsyncpa [#allocation5], 1

</llo_original>
